<compile_context>
chip_gen: v7x
topology: tpu7x:2x2x1
jax: 0.10.0
libtpu: 0.0.40
codegen_flags: <defaults>
</compile_context>

<pallas_src>
import jax
import jax.numpy as jnp
from jax.experimental import pallas as pl
from jax.experimental.pallas import tpu as pltpu


def adaptive_invariant_kernel(x_ref, w1_ref, b1_ref, w2_ref, b2_ref,
                              rhs_ref, out_ref):
    # Phi: Linear -> ReLU -> Linear (MXU matmuls, f32 accumulation).
    # x stays f32 in HBM; for the bf16 path it is cast per-tile here (rides a
    # VPU slot under the MXU pushes) instead of a wrapper-side HBM pass.
    x = x_ref[...].astype(w1_ref.dtype)
    h = jnp.dot(x, w1_ref[...], preferred_element_type=jnp.float32)
    h = jnp.maximum(h + b1_ref[...], 0.0)
    rep = jnp.dot(h.astype(w2_ref.dtype), w2_ref[...],
                  preferred_element_type=jnp.float32) + b2_ref[...]
    # One fused head matmul: rhs = [beta | eta_env | I_P (| 0-pad)], so a
    # single output tile carries f_beta, f_eta and the rep pass-through.
    out_ref[...] = jnp.dot(rep, rhs_ref[...], preferred_element_type=jnp.float32)


def _round_up(v, m):
    return ((v + m - 1) // m) * m


def _choose_batch_tiling(batch, sublane=8):
    """Pick (TB, padded_batch).  Large tiles amortize the ~0.35us/step grid
    overhead; batches that fit in <=2 tiles are split into exactly two so the
    'parallel' axis can be sharded across v7x's two TensorCores."""
    bs = _round_up(batch, sublane)
    if bs <= 2 * sublane:
        tb = bs                                   # too small to split
    elif bs <= 2048:
        tb = _round_up((bs + 1) // 2, sublane)    # exactly 2 big steps
    else:
        # TODO(synk): sweep 512/1024 on real shapes (85% vs 86% HBM roofline);
        # 512 keeps the padded tail small.
        tb = 512
    return tb, _round_up(bs, tb)


def _vmem_capacity_bytes():
    try:
        return int(pltpu.get_tpu_info().vmem_capacity_bytes)
    except Exception:
        return 64 * 1024 * 1024      # conservative default (v7x per-TC VMEM)


def _derive_vmem_limit(tb, d, h, p, w, x_bytes, w_bytes):
    # Streamed tiles are double-buffered by the pipeline; constant-index
    # resident inputs also cost ~2x their size (default double buffering).
    streamed = 2 * tb * (d * x_bytes + w * 4)
    resident = 2 * (d * h * w_bytes + h * 4 + h * p * w_bytes + p * 4 + p * w * 4)
    need = streamed + resident + (4 << 20)            # compiler/internal slack
    cap = max(_vmem_capacity_bytes() - (8 << 20), 32 << 20)
    return int(min(max(need, 32 << 20), cap))


def build_fused_head_rhs(beta, eta):
    """Fused head right-hand side: columns [beta | eta | I_P (| 0-pad)].
    Pure function of the parameters: build it once per parameter update and
    pass it to adaptive_invariant_forward(rhs=...) to avoid per-call rebuilds."""
    p, o = beta.shape
    f = 2 * o + p
    w_pad = _round_up(f, 128)
    # Lane-pad only when the extra zero-lane writeback is small (<= 1/3 of the
    # useful width); tiny heads keep the exact width to save HBM bytes.
    w = w_pad if (w_pad - f) * 3 <= f else f
    rhs = jnp.zeros((p, w), jnp.float32)
    rhs = rhs.at[:, :o].set(beta.astype(jnp.float32))
    rhs = rhs.at[:, o:2 * o].set(eta.astype(jnp.float32))
    rhs = rhs.at[:, 2 * o:2 * o + p].set(jnp.eye(p, dtype=jnp.float32))
    return rhs


def adaptive_invariant_forward(x, w1, b1, w2, b2, beta, etas, env_ind,
                               compute_dtype=jnp.float32, rhs=None):
    """Fused AdaptiveInvariantNN forward.  Returns (f_beta, f_eta, rep)."""
    # TODO(synk): rep_learning=True / fast_eta branches of forward() are not
    # implemented (they bypass Phi / the eta table); softmax_layer is unused
    # in forward() and therefore omitted.
    B, D = x.shape
    H = w1.shape[1]
    P = w2.shape[1]          # phi_odim
    O = beta.shape[1]        # out_dim

    # env selection in the wrapper: one (P, O) slice gather is trivial in XLA
    # and removes scalar prefetch + the (E, P, W) per-call rhs construction.
    if rhs is None:
        rhs = build_fused_head_rhs(beta, jnp.asarray(etas)[env_ind])
    W = rhs.shape[1]

    # Only the small resident weights are pre-cast for the reduced-precision
    # path; x stays f32 in HBM and is cast per-tile inside the kernel.
    # (On v7x, compute_dtype=bf16 halves resident weight VMEM and hits MXU
    #  peak; note v7x MXU has no int support — do not substitute int8.)
    if compute_dtype != jnp.float32:
        w1 = w1.astype(compute_dtype)
        w2 = w2.astype(compute_dtype)

    # Batch tiling: pad up to a multiple of the chosen tile (pad rows sliced
    # off below), grid covers it exactly.
    TB, Bp = _choose_batch_tiling(B)
    if Bp != B:
        x = jnp.pad(x, ((0, Bp - B), (0, 0)))
    grid = (Bp // TB,)

    vmem_limit = _derive_vmem_limit(TB, D, H, P, W,
                                    x.dtype.itemsize, w1.dtype.itemsize)

    out = pl.pallas_call(
        adaptive_invariant_kernel,
        grid=grid,
        in_specs=[
            pl.BlockSpec((TB, D), lambda i: (i, 0)),   # x    (streamed)
            pl.BlockSpec((D, H), lambda i: (0, 0)),    # W1   (VMEM-resident)
            pl.BlockSpec((1, H), lambda i: (0, 0)),    # b1   (resident, f32)
            pl.BlockSpec((H, P), lambda i: (0, 0)),    # W2   (resident)
            pl.BlockSpec((1, P), lambda i: (0, 0)),    # b2   (resident, f32)
            pl.BlockSpec((P, W), lambda i: (0, 0)),    # fused head rhs
        ],
        out_specs=pl.BlockSpec((TB, W), lambda i: (i, 0)),
        out_shape=jax.ShapeDtypeStruct((Bp, W), jnp.float32),
        compiler_params=pltpu.CompilerParams(
            # Batch axis is embarrassingly parallel -> v7x's 2 TCs split it;
            # harmless on single-TC v5e/v6e.
            dimension_semantics=("parallel",),
            vmem_limit_bytes=vmem_limit,
        ),
    )(x, w1, b1, w2, b2, rhs)
    # TODO(synk): for very large D/H on v7x (64 MiB VMEM) add an 'arbitrary'
    # K-tiling grid axis over H with an f32 accumulator instead of keeping W1
    # fully resident.

    out = out[:B]
    f_beta = out[:, :O]
    f_eta = out[:, O:2 * O]
    rep = out[:, 2 * O:2 * O + P]
    return f_beta, f_eta, rep


def reference_forward(x, w1, b1, w2, b2, beta, etas, env_ind):
    rep = jnp.maximum(x @ w1 + b1, 0.0) @ w2 + b2
    return rep @ beta, rep @ etas[env_ind], rep


if __name__ == "__main__":
    # Small shapes consistent with the module's forward:
    #   x: (batch, input_dim); Phi: input_dim -> hidden -> phi_odim.
    # batch=50 exercises the pad-to-tile path and a 2-step parallel grid.
    B, input_dim, hidden, phi_odim = 50, 16, 32, 8
    out_dim = 1
    n_batch_envs = 3
    env_ind = 1

    key = jax.random.PRNGKey(0)
    k1, k2, k3, k4, k5, k6 = jax.random.split(key, 6)

    x = jax.random.normal(k1, (B, input_dim), dtype=jnp.float32)

    # Phi weights (deterministic synthetic init; Linear stored as (in, out)).
    w1 = 0.1 * jax.random.normal(k2, (input_dim, hidden), dtype=jnp.float32)
    b1 = 0.1 * jax.random.normal(k3, (1, hidden), dtype=jnp.float32)
    w2 = 0.1 * jax.random.normal(k4, (hidden, phi_odim), dtype=jnp.float32)
    b2 = 0.1 * jax.random.normal(k5, (1, phi_odim), dtype=jnp.float32)

    # beta: zeros(phi_odim, out_dim) with beta[i, i] = 1 for i < out_dim.
    beta = jnp.zeros((phi_odim, out_dim), dtype=jnp.float32)
    beta = beta.at[jnp.arange(out_dim), jnp.arange(out_dim)].set(1.0)

    # etas: module __init__ zero-initializes them; use small deterministic
    # nonzero values so the rep @ etas[env_ind] path is exercised.
    etas = 0.1 * jax.random.normal(
        k6, (n_batch_envs, phi_odim, out_dim), dtype=jnp.float32)

    f_beta, f_eta, rep = adaptive_invariant_forward(
        x, w1, b1, w2, b2, beta, etas, env_ind)
    jax.block_until_ready((f_beta, f_eta, rep))

    rf_beta, rf_eta, r_rep = reference_forward(
        x, w1, b1, w2, b2, beta, etas, env_ind)

    assert f_beta.shape == rf_beta.shape
    assert f_eta.shape == rf_eta.shape
    assert rep.shape == r_rep.shape
    assert jnp.allclose(f_beta, rf_beta, rtol=1e-5, atol=1e-5)
    assert jnp.allclose(f_eta, rf_eta, rtol=1e-5, atol=1e-5)
    assert jnp.allclose(rep, r_rep, rtol=1e-5, atol=1e-5)

    print("KERNEL_OK")
</pallas_src>

<mosaic_0001>
module attributes {stable_mosaic.version = 11 : i64} {
  func.func @adaptive_invariant_kernel(%arg0: i32, %arg1: memref<32x16xf32, #tpu.memory_space<vmem>>, %arg2: memref<16x32xf32, #tpu.memory_space<vmem>>, %arg3: memref<1x32xf32, #tpu.memory_space<vmem>>, %arg4: memref<32x8xf32, #tpu.memory_space<vmem>>, %arg5: memref<1x8xf32, #tpu.memory_space<vmem>>, %arg6: memref<8x10xf32, #tpu.memory_space<vmem>>, %arg7: memref<32x10xf32, #tpu.memory_space<vmem>>) attributes {dimension_semantics = [#tpu.dimension_semantics<parallel>], iteration_bounds = array<i64: 2>, scalar_prefetch = 0 : i64, scratch_operands = 0 : i64, tpu.core_type = #tpu.core_type<tc>, window_params = [{transform_indices = @transform_0, window_bounds = array<i64: 32, 16>}, {pipeline_mode = #tpu.pipeline_mode<synchronous>, transform_indices = @transform_1, window_bounds = array<i64: 16, 32>}, {pipeline_mode = #tpu.pipeline_mode<synchronous>, transform_indices = @transform_2, window_bounds = array<i64: 1, 32>}, {pipeline_mode = #tpu.pipeline_mode<synchronous>, transform_indices = @transform_3, window_bounds = array<i64: 32, 8>}, {pipeline_mode = #tpu.pipeline_mode<synchronous>, transform_indices = @transform_4, window_bounds = array<i64: 1, 8>}, {pipeline_mode = #tpu.pipeline_mode<synchronous>, transform_indices = @transform_5, window_bounds = array<i64: 8, 10>}, {transform_indices = @transform_6, window_bounds = array<i64: 32, 10>}]} {
    %c0 = arith.constant 0 : index
    %c0_0 = arith.constant 0 : index
    %0 = vector.load %arg1[%c0, %c0_0] : memref<32x16xf32, #tpu.memory_space<vmem>>, vector<32x16xf32>
    %c0_1 = arith.constant 0 : index
    %c0_2 = arith.constant 0 : index
    %1 = vector.load %arg2[%c0_1, %c0_2] : memref<16x32xf32, #tpu.memory_space<vmem>>, vector<16x32xf32>
    %cst = arith.constant dense<0.000000e+00> : vector<32x32xf32>
    %2 = tpu.matmul %0, %1, %cst {dimension_numbers = #tpu.dot_dimension_numbers<[1], [0], [0], [1], [0, 0, 1, 1], [], []>} : vector<32x16xf32>, vector<16x32xf32>, vector<32x32xf32> -> vector<32x32xf32>
    %c0_3 = arith.constant 0 : index
    %c0_4 = arith.constant 0 : index
    %3 = vector.load %arg3[%c0_3, %c0_4] : memref<1x32xf32, #tpu.memory_space<vmem>>, vector<1x32xf32>
    %4 = vector.broadcast %3 : vector<1x32xf32> to vector<32x32xf32>
    %5 = arith.addf %2, %4 : vector<32x32xf32>
    %cst_5 = arith.constant 0.000000e+00 : f32
    %6 = vector.broadcast %cst_5 : f32 to vector<32x32xf32>
    %7 = arith.maximumf %5, %6 : vector<32x32xf32>
    %c0_6 = arith.constant 0 : index
    %c0_7 = arith.constant 0 : index
    %8 = vector.load %arg4[%c0_6, %c0_7] : memref<32x8xf32, #tpu.memory_space<vmem>>, vector<32x8xf32>
    %cst_8 = arith.constant dense<0.000000e+00> : vector<32x8xf32>
    %9 = tpu.matmul %7, %8, %cst_8 {dimension_numbers = #tpu.dot_dimension_numbers<[1], [0], [0], [1], [0, 0, 1, 1], [], []>} : vector<32x32xf32>, vector<32x8xf32>, vector<32x8xf32> -> vector<32x8xf32>
    %c0_9 = arith.constant 0 : index
    %c0_10 = arith.constant 0 : index
    %10 = vector.load %arg5[%c0_9, %c0_10] : memref<1x8xf32, #tpu.memory_space<vmem>>, vector<1x8xf32>
    %11 = vector.broadcast %10 : vector<1x8xf32> to vector<32x8xf32>
    %12 = arith.addf %9, %11 : vector<32x8xf32>
    %c0_11 = arith.constant 0 : index
    %c0_12 = arith.constant 0 : index
    %13 = vector.load %arg6[%c0_11, %c0_12] : memref<8x10xf32, #tpu.memory_space<vmem>>, vector<8x10xf32>
    %cst_13 = arith.constant dense<0.000000e+00> : vector<32x10xf32>
    %14 = tpu.matmul %12, %13, %cst_13 {dimension_numbers = #tpu.dot_dimension_numbers<[1], [0], [0], [1], [0, 0, 1, 1], [], []>} : vector<32x8xf32>, vector<8x10xf32>, vector<32x10xf32> -> vector<32x10xf32>
    %c0_14 = arith.constant 0 : index
    %c0_15 = arith.constant 0 : index
    %15 = vector.load %arg7[%c0_14, %c0_15] : memref<32x10xf32, #tpu.memory_space<vmem>>, vector<32x10xf32>
    tpu.vector_store %arg7[%c0_14, %c0_15], %14 {strides = array<i32>} : memref<32x10xf32, #tpu.memory_space<vmem>>, vector<32x10xf32>,
    return
  }
  func.func @transform_0(%arg0: i32) -> (i32, i32) {
    %c0_i32 = arith.constant 0 : i32
    %c0_i32_0 = arith.constant 0 : i32
    return %arg0, %c0_i32 : i32, i32
  }
  func.func @transform_1(%arg0: i32) -> (i32, i32) {
    %c0_i32 = arith.constant 0 : i32
    %c0_i32_0 = arith.constant 0 : i32
    %c0_i32_1 = arith.constant 0 : i32
    return %c0_i32, %c0_i32_0 : i32, i32
  }
  func.func @transform_2(%arg0: i32) -> (i32, i32) {
    %c0_i32 = arith.constant 0 : i32
    %c0_i32_0 = arith.constant 0 : i32
    %c0_i32_1 = arith.constant 0 : i32
    return %c0_i32, %c0_i32_0 : i32, i32
  }
  func.func @transform_3(%arg0: i32) -> (i32, i32) {
    %c0_i32 = arith.constant 0 : i32
    %c0_i32_0 = arith.constant 0 : i32
    %c0_i32_1 = arith.constant 0 : i32
    return %c0_i32, %c0_i32_0 : i32, i32
  }
  func.func @transform_4(%arg0: i32) -> (i32, i32) {
    %c0_i32 = arith.constant 0 : i32
    %c0_i32_0 = arith.constant 0 : i32
    %c0_i32_1 = arith.constant 0 : i32
    return %c0_i32, %c0_i32_0 : i32, i32
  }
  func.func @transform_5(%arg0: i32) -> (i32, i32) {
    %c0_i32 = arith.constant 0 : i32
    %c0_i32_0 = arith.constant 0 : i32
    %c0_i32_1 = arith.constant 0 : i32
    return %c0_i32, %c0_i32_0 : i32, i32
  }
  func.func @transform_6(%arg0: i32) -> (i32, i32) {
    %c0_i32 = arith.constant 0 : i32
    %c0_i32_0 = arith.constant 0 : i32
    return %arg0, %c0_i32 : i32, i32
  }
}

</mosaic_0001>

<llo_original>
// kernel: tpu_custom_call.1
$region0: #{tpu_custom_call.1}
  #allocation0 [shape = 'u32[]', space=smem, size = 0x4, offset = 0x4, fixed_abs, tag = 'smem constant byte address 0x4 - core index']
  #allocation1 [shape = 'u32[144,128]{1,0:T(1,128)}', space=vmem, size = 0x12000, scoped, tag = 'internal scratch']
  %s0 = inlined_call_operand.vmem [shape: f32[64,16], index: 0, kind: input, shape index: {}]
  %s1 = inlined_call_operand.vmem [shape: f32[16,32], index: 1, kind: input, shape index: {}]
  %s2 = inlined_call_operand.vmem [shape: f32[1,32], index: 2, kind: input, shape index: {}]
  %s3 = inlined_call_operand.vmem [shape: f32[32,8], index: 3, kind: input, shape index: {}]
  %s4 = inlined_call_operand.vmem [shape: f32[1,8], index: 4, kind: input, shape index: {}]
  %s5 = inlined_call_operand.vmem [shape: f32[8,10], index: 5, kind: input, shape index: {}]
  %s6 = inlined_call_operand.vmem [shape: f32[64,10], index: 6, kind: output, shape index: {}]
  %s7 = sld [smem:[#allocation0]]
  $region57: #{tpu_custom_call.1} parent=0
    _
  %s9 = ssub.s32 1, %s7
  %s10 = scalar_select 0, %s9, %s7
  loop: start=0, step=1, limit=4
  $region2: #{tpu_custom_call.1} parent=0 // loop_pre_header
    _
  $region3: #{tpu_custom_call.1} parent=0 // loop_header
    %s12 = sphi 0, %s16
    %p13 = scmp.ge.s32.totalorder %s12, 4
    %s22 = sphi 0, %s24
    %s25 = sphi 0, %s22
    %s26 = sphi 0, %s25
    %s42 = sphi 0, %s26
    %s46 = sphi 0, %s46
    %s48 = sphi 0, %s46
    %s49 = sphi 0, %s48
    %s63 = sphi 0, %s49
    %s67 = sphi 0, %s67
    %s69 = sphi 0, %s67
    %s70 = sphi 0, %s69
    %s84 = sphi 0, %s70
    %s88 = sphi 0, %s88
    %s90 = sphi 0, %s88
    %s91 = sphi 0, %s90
    %s105 = sphi 0, %s91
    %s109 = sphi 0, %s109
    %s111 = sphi 0, %s109
    %s112 = sphi 0, %s111
    %s126 = sphi 0, %s112
    %s130 = sphi 0, %s130
    %s132 = sphi 0, %s130
    %s133 = sphi 0, %s132
    %s147 = sphi 0, %s133
    %s153 = sphi 0, %s155
    %s156 = sphi 0, %s153
    %s157 = sphi 0, %s156
    %s173 = sphi 0, %s157
  $region4: #{tpu_custom_call.1} parent=0 // loop_header_branch
    %15 = sbr.rel (%p13) target = $region8
  $region5: #{tpu_custom_call.1} parent=0 // loop_body
    %s17 = ssub.s32 %s12, 1
    %s18 = ssub.s32 %s12, 2
    %s19 = sadd.s32 %s12, 1
    %s20 = ssub.s32 %s12, %s19
    %p21 = scmp.eq.s32.totalorder %s20, 0
    %s23 = sadd.s32 %s22, 1
    %s24 = scalar_select %p21, %s22, %s23
    %p27 = pneg %p21
    %p28 = scmp.eq.s32.totalorder %s12, 1
    %p29 = por %p27, %p28
    %p30 = scmp.ne.s32.totalorder %s22, %s25
    %p31 = scmp.eq.s32.totalorder %s12, 0
    %p32 = por %p30, %p31
    %p33 = scmp.ne.s32.totalorder %s22, %s25
    %p34 = scmp.eq.s32.totalorder %s17, 1
    %p35 = por %p33, %p34
    %p36 = scmp.ne.s32.totalorder %s25, %s26
    %p37 = scmp.eq.s32.totalorder %s17, 0
    %p38 = por %p36, %p37
    %p39 = scmp.ne.s32.totalorder %s25, %s26
    %p40 = scmp.eq.s32.totalorder %s18, 1
    %p41 = por %p39, %p40
    %p43 = scmp.ne.s32.totalorder %s26, %s42
    %p44 = scmp.eq.s32.totalorder %s18, 0
    %p45 = por %p43, %p44
    %s47 = sadd.s32 %s46, 1
    %p50 = scmp.eq.s32.totalorder %s12, 1
    %p51 = scmp.ne.s32.totalorder %s46, %s48
    %p52 = scmp.eq.s32.totalorder %s12, 0
    %p53 = por %p51, %p52
    %p54 = scmp.ne.s32.totalorder %s46, %s48
    %p55 = scmp.eq.s32.totalorder %s17, 1
    %p56 = por %p54, %p55
    %p57 = scmp.ne.s32.totalorder %s48, %s49
    %p58 = scmp.eq.s32.totalorder %s17, 0
    %p59 = por %p57, %p58
    %p60 = scmp.ne.s32.totalorder %s48, %s49
    %p61 = scmp.eq.s32.totalorder %s18, 1
    %p62 = por %p60, %p61
    %p64 = scmp.ne.s32.totalorder %s49, %s63
    %p65 = scmp.eq.s32.totalorder %s18, 0
    %p66 = por %p64, %p65
    %s68 = sadd.s32 %s67, 1
    %p71 = scmp.eq.s32.totalorder %s12, 1
    %p72 = scmp.ne.s32.totalorder %s67, %s69
    %p73 = scmp.eq.s32.totalorder %s12, 0
    %p74 = por %p72, %p73
    %p75 = scmp.ne.s32.totalorder %s67, %s69
    %p76 = scmp.eq.s32.totalorder %s17, 1
    %p77 = por %p75, %p76
    %p78 = scmp.ne.s32.totalorder %s69, %s70
    %p79 = scmp.eq.s32.totalorder %s17, 0
    %p80 = por %p78, %p79
    %p81 = scmp.ne.s32.totalorder %s69, %s70
    %p82 = scmp.eq.s32.totalorder %s18, 1
    %p83 = por %p81, %p82
    %p85 = scmp.ne.s32.totalorder %s70, %s84
    %p86 = scmp.eq.s32.totalorder %s18, 0
    %p87 = por %p85, %p86
    %s89 = sadd.s32 %s88, 1
    %p92 = scmp.eq.s32.totalorder %s12, 1
    %p93 = scmp.ne.s32.totalorder %s88, %s90
    %p94 = scmp.eq.s32.totalorder %s12, 0
    %p95 = por %p93, %p94
    %p96 = scmp.ne.s32.totalorder %s88, %s90
    %p97 = scmp.eq.s32.totalorder %s17, 1
    %p98 = por %p96, %p97
    %p99 = scmp.ne.s32.totalorder %s90, %s91
    %p100 = scmp.eq.s32.totalorder %s17, 0
    %p101 = por %p99, %p100
    %p102 = scmp.ne.s32.totalorder %s90, %s91
    %p103 = scmp.eq.s32.totalorder %s18, 1
    %p104 = por %p102, %p103
    %p106 = scmp.ne.s32.totalorder %s91, %s105
    %p107 = scmp.eq.s32.totalorder %s18, 0
    %p108 = por %p106, %p107
    %s110 = sadd.s32 %s109, 1
    %p113 = scmp.eq.s32.totalorder %s12, 1
    %p114 = scmp.ne.s32.totalorder %s109, %s111
    %p115 = scmp.eq.s32.totalorder %s12, 0
    %p116 = por %p114, %p115
    %p117 = scmp.ne.s32.totalorder %s109, %s111
    %p118 = scmp.eq.s32.totalorder %s17, 1
    %p119 = por %p117, %p118
    %p120 = scmp.ne.s32.totalorder %s111, %s112
    %p121 = scmp.eq.s32.totalorder %s17, 0
    %p122 = por %p120, %p121
    %p123 = scmp.ne.s32.totalorder %s111, %s112
    %p124 = scmp.eq.s32.totalorder %s18, 1
    %p125 = por %p123, %p124
    %p127 = scmp.ne.s32.totalorder %s112, %s126
    %p128 = scmp.eq.s32.totalorder %s18, 0
    %p129 = por %p127, %p128
    %s131 = sadd.s32 %s130, 1
    %p134 = scmp.eq.s32.totalorder %s12, 1
    %p135 = scmp.ne.s32.totalorder %s130, %s132
    %p136 = scmp.eq.s32.totalorder %s12, 0
    %p137 = por %p135, %p136
    %p138 = scmp.ne.s32.totalorder %s130, %s132
    %p139 = scmp.eq.s32.totalorder %s17, 1
    %p140 = por %p138, %p139
    %p141 = scmp.ne.s32.totalorder %s132, %s133
    %p142 = scmp.eq.s32.totalorder %s17, 0
    %p143 = por %p141, %p142
    %p144 = scmp.ne.s32.totalorder %s132, %s133
    %p145 = scmp.eq.s32.totalorder %s18, 1
    %p146 = por %p144, %p145
    %p148 = scmp.ne.s32.totalorder %s133, %s147
    %p149 = scmp.eq.s32.totalorder %s18, 0
    %p150 = por %p148, %p149
    %s151 = ssub.s32 %s12, %s19
    %p152 = scmp.eq.s32.totalorder %s151, 0
    %s154 = sadd.s32 %s153, 1
    %s155 = scalar_select %p152, %s153, %s154
    %p158 = pneg %p152
    %p159 = scmp.eq.s32.totalorder %s12, 1
    %p160 = por %p158, %p159
    %p161 = scmp.ne.s32.totalorder %s153, %s156
    %p162 = scmp.eq.s32.totalorder %s12, 0
    %p163 = por %p161, %p162
    %p164 = scmp.ne.s32.totalorder %s153, %s156
    %p165 = scmp.eq.s32.totalorder %s17, 1
    %p166 = por %p164, %p165
    %p167 = scmp.ne.s32.totalorder %s156, %s157
    %p168 = scmp.eq.s32.totalorder %s17, 0
    %p169 = por %p167, %p168
    %p170 = scmp.ne.s32.totalorder %s156, %s157
    %p171 = scmp.eq.s32.totalorder %s18, 1
    %p172 = por %p170, %p171
    %p174 = scmp.ne.s32.totalorder %s157, %s173
    %p175 = scmp.eq.s32.totalorder %s18, 0
    %p176 = por %p174, %p175
    %p177 = scmp.le.s32.totalorder 1, %s12
    %p178 = scmp.lt.s32.totalorder %s12, 3
    %p179 = pnand %p177, %p178
    %p180 = pneg %p179
    // Predicated region
    $region9: #{tpu_custom_call.1} parent=5 // pred_check
      _
    $region10: #{tpu_custom_call.1} parent=5 // pred_check_branch
      %182 = sbr.rel (%p179) target = $region12
    $region11: #{tpu_custom_call.1} parent=5 // pred_region
      %s183 = ssub.s32 %s12, 1
      // Predicated region
      $region13: #{tpu_custom_call.1} parent=11 // pred_check
        %p184 = pneg %p59
      $region14: #{tpu_custom_call.1} parent=11 // pred_check_branch
        %186 = sbr.rel (%p184) target = $region16
      $region15: #{tpu_custom_call.1} parent=11 // pred_region
        _
      $region16: #{tpu_custom_call.1} parent=11 // pred_fallthru
        _
      // Predicated region
      $region17: #{tpu_custom_call.1} parent=11 // pred_check
        %p187 = pneg %p80
      $region18: #{tpu_custom_call.1} parent=11 // pred_check_branch
        %189 = sbr.rel (%p187) target = $region20
      $region19: #{tpu_custom_call.1} parent=11 // pred_region
        _
      $region20: #{tpu_custom_call.1} parent=11 // pred_fallthru
        _
      // Predicated region
      $region21: #{tpu_custom_call.1} parent=11 // pred_check
        %p190 = pneg %p101
      $region22: #{tpu_custom_call.1} parent=11 // pred_check_branch
        %192 = sbr.rel (%p190) target = $region24
      $region23: #{tpu_custom_call.1} parent=11 // pred_region
        _
      $region24: #{tpu_custom_call.1} parent=11 // pred_fallthru
        _
      // Predicated region
      $region25: #{tpu_custom_call.1} parent=11 // pred_check
        %p193 = pneg %p122
      $region26: #{tpu_custom_call.1} parent=11 // pred_check_branch
        %195 = sbr.rel (%p193) target = $region28
      $region27: #{tpu_custom_call.1} parent=11 // pred_region
        _
      $region28: #{tpu_custom_call.1} parent=11 // pred_fallthru
        _
      // Predicated region
      $region29: #{tpu_custom_call.1} parent=11 // pred_check
        %p196 = pneg %p143
      $region30: #{tpu_custom_call.1} parent=11 // pred_check_branch
        %198 = sbr.rel (%p196) target = $region32
      $region31: #{tpu_custom_call.1} parent=11 // pred_region
        _
      $region32: #{tpu_custom_call.1} parent=11 // pred_fallthru
        _
    $region12: #{tpu_custom_call.1} parent=5 // pred_fallthru
      _
    %p199 = scmp.lt.s32.totalorder %s12, 2
    // Predicated region
    $region33: #{tpu_custom_call.1} parent=5 // pred_check
      %p200 = pneg %p199
    $region34: #{tpu_custom_call.1} parent=5 // pred_check_branch
      %202 = sbr.rel (%p200) target = $region36
    $region35: #{tpu_custom_call.1} parent=5 // pred_region
      // Predicated region
      $region37: #{tpu_custom_call.1} parent=35 // pred_check
        %p203 = pneg %p32
      $region38: #{tpu_custom_call.1} parent=35 // pred_check_branch
        %205 = sbr.rel (%p203) target = $region40
      $region39: #{tpu_custom_call.1} parent=35 // pred_region
        %s206 = smul.u32 4, %s12
        %p207 = scmp.lt.s32.totalorder %s206, 7
        %s208 = scalar_select %p207, %s206, 7
        %s209 = smul.addr %s208, 8
        %s210 = scalar_lea.vmem %s0, %s209
        %s211 = smul.u32 4, %s12
      $region40: #{tpu_custom_call.1} parent=35 // pred_fallthru
        _
    $region36: #{tpu_custom_call.1} parent=5 // pred_fallthru
      _
    %p212 = scmp.le.s32.totalorder 1, %s12
    %p213 = scmp.lt.s32.totalorder %s12, 3
    %p214 = pnand %p212, %p213
    %p215 = pneg %p214
    // Predicated region
    $region41: #{tpu_custom_call.1} parent=5 // pred_check
      _
    $region42: #{tpu_custom_call.1} parent=5 // pred_check_branch
      %217 = sbr.rel (%p214) target = $region44
    $region43: #{tpu_custom_call.1} parent=5 // pred_region
      %s218 = ssub.s32 %s12, 1
      %s219 = smul.u32 4, %s17
      %p220 = scmp.lt.s32.totalorder %s219, 7
      %s221 = scalar_select %p220, %s219, 7
      %s222 = smul.addr %s221, 8
      %s223 = scalar_lea.vmem %s0, %s222
      %p224 = pneg %p38
      %p225 = pneg %p35
      %p226 = pneg %p59
      %p227 = pneg %p56
      %p228 = pneg %p80
      %p229 = pneg %p77
      %p230 = pneg %p101
      %p231 = pneg %p98
      %p232 = pneg %p122
      %p233 = pneg %p119
      %p234 = pneg %p143
      %p235 = pneg %p140
      %p236 = pneg %p169
      %p237 = pneg %p166
      %s238 = smul.u32 4, %s17
      %p239 = scmp.lt.s32.totalorder %s238, 7
      %s240 = scalar_select %p239, %s238, 7
      %s241 = smul.addr %s240, 8
      %s242 = scalar_lea.vmem %s6, %s241
      %s243 = smul.u32 4, %s17
      %p244 = scmp.lt.s32.totalorder %s243, 7
      %s245 = scalar_select %p244, %s243, 7
      %s246 = smul.addr %s245, 8
      %s247 = scalar_lea.vmem %s0, %s246
      %s248 = smul.u32 4, %s17
      %s249 = smul.u32 4, %s17
      %p250 = scmp.lt.s32.totalorder %s249, 7
      %s251 = scalar_select %p250, %s249, 7
      %s252 = smul.addr %s251, 8
      %s253 = scalar_lea.vmem %s6, %s252
      %s254 = smul.u32 4, %s17
      %v255 = vld [vmem:[%s247] sm:$0xff]
      %v256 = vld [vmem:[%s247 + $0x8] sm:$0xff]
      %v257 = vld [vmem:[%s247 + $0x10] sm:$0xff]
      %v258 = vld [vmem:[%s247 + $0x18] sm:$0xff]
      %v259 = vld [vmem:[%s1] sm:$0xff]
      %v260 = vld [vmem:[%s1 + $0x8] sm:$0xff]
      %v261 = vld [vmem:[%s2] sm:$0x1]
      %v263 = vlaneseq
      %v264 = vshrl.u32 %v263, 7
      %v265 = vsub.s32 0, %v264
      %v266 = vrot.slane %v261, %v265
      %vm268 = vcmask 130048
      %v270 = vsel %vm268, %v255, 0
      %v273 = vsel %vm268, %v256, 0
      %v276 = vsel %vm268, %v257, 0
      %v279 = vsel %vm268, %v258, 0
      %281 = vmatprep.subr.mxu0 0.0
      %282 = vmatpush1.msra.mxu0 %v259
      %283 = vmatprep.subr.mxu0 0.0
      %284 = vmatpush1.msra.mxu0 %v260
      %285 = vmatprep.subr.mxu0 0.0
      %286 = vmatpush1.msra.mxu0 0.0
      %287 = vmatprep.subr.mxu0 0.0
      %288 = vmatpush1.msra.mxu0 0.0
      %289 = vmatprep.subr.mxu0 0.0
      %290 = vmatpush1.msra.mxu0 0.0
      %291 = vmatprep.subr.mxu0 0.0
      %292 = vmatpush1.msra.mxu0 0.0
      %293 = vmatprep.subr.mxu0 0.0
      %294 = vmatpush1.msra.mxu0 0.0
      %295 = vmatprep.subr.mxu0 0.0
      %296 = vmatpush1.msra.mxu0 0.0
      %297 = vmatprep.subr.mxu0 0.0
      %298 = vmatpush1.msra.mxu0 0.0
      %299 = vmatprep.subr.mxu0 0.0
      %300 = vmatpush1.msra.mxu0 0.0
      %301 = vmatprep.subr.mxu0 0.0
      %302 = vmatpush1.msra.mxu0 0.0
      %303 = vmatprep.subr.mxu0 0.0
      %304 = vmatpush1.msra.mxu0 0.0
      %305 = vmatprep.subr.mxu0 0.0
      %306 = vmatpush1.msra.mxu0 0.0
      %307 = vmatprep.subr.mxu0 0.0
      %308 = vmatpush1.msra.mxu0 0.0
      %309 = vmatprep.subr.mxu0 0.0
      %310 = vmatpush1.msra.mxu0 0.0
      %311 = vmatprep.subr.mxu0 0.0
      %312 = vmatpush1.msra.mxu0 0.0
      %313 = vmatprep.subr.mxu0 0.0
      %314 = vmatpush1.msra.mxu0 0.0
      %315 = vmatprep.subr.mxu0 0.0
      %316 = vmatpush1.msra.mxu0 0.0
      %317 = vmatprep.subr.mxu0 0.0
      %318 = vmatpush1.msra.mxu0 0.0
      %319 = vmatprep.subr.mxu0 0.0
      %320 = vmatpush1.msra.mxu0 0.0
      %321 = vmatprep.subr.mxu0 0.0
      %322 = vmatpush1.msra.mxu0 0.0
      %323 = vmatprep.subr.mxu0 0.0
      %324 = vmatpush1.msra.mxu0 0.0
      %325 = vmatprep.subr.mxu0 0.0
      %326 = vmatpush1.msra.mxu0 0.0
      %327 = vmatprep.subr.mxu0 0.0
      %328 = vmatpush1.msra.mxu0 0.0
      %329 = vmatprep.subr.mxu0 0.0
      %330 = vmatpush1.msra.mxu0 0.0
      %331 = vmatprep.subr.mxu0 0.0
      %332 = vmatpush1.msra.mxu0 0.0
      %333 = vmatprep.subr.mxu0 0.0
      %334 = vmatpush1.msra.mxu0 0.0
      %335 = vmatprep.subr.mxu0 0.0
      %336 = vmatpush1.msra.mxu0 0.0
      %337 = vmatprep.subr.mxu0 0.0
      %338 = vmatpush1.msra.mxu0 0.0
      %339 = vmatprep.subr.mxu0 0.0
      %340 = vmatpush1.msra.mxu0 0.0
      %341 = vmatprep.subr.mxu0 0.0
      %342 = vmatpush1.msra.mxu0 0.0
      %343 = vmatprep.subr.mxu0 0.0
      %344 = vmatpush1.msra.mxu0 0.0
      %345 = vmatprep.mubr.f32.mxu0 0.0
      %346 = vmatmul.mubr.f32.gmra.mrb[0].mxu0 %v270
      %v347 = vpop.f32.mrb[0].mxu0
      %v348 = vadd.f32 %v266, %v347
      %v349 = vpop.f32.mrb[0].mxu0
      %350 = vmatprep.mubr.f32.mxu0 0.0
      %351 = vmatmul.mubr.f32.gmra.mrb[0].mxu0 %v273
      %v352 = vpop.f32.mrb[0].mxu0
      %v353 = vadd.f32 %v266, %v352
      %v354 = vpop.f32.mrb[0].mxu0
      %355 = vmatprep.mubr.f32.mxu0 0.0
      %356 = vmatmul.mubr.f32.gmra.mrb[0].mxu0 %v276
      %v357 = vpop.f32.mrb[0].mxu0
      %v358 = vadd.f32 %v266, %v357
      %v359 = vpop.f32.mrb[0].mxu0
      %360 = vmatprep.mubr.f32.mxu0 0.0
      %361 = vmatmul.mubr.f32.gmra.mrb[0].mxu0 %v279
      %v362 = vpop.f32.mrb[0].mxu0
      %v363 = vadd.f32 %v266, %v362
      %v364 = vpop.f32.mrb[0].mxu0
      %365 = vdwg.mxu0
      %v366 = vmax.f32 %v348, 0.0
      %v367 = vmax.f32 %v353, 0.0
      %v368 = vmax.f32 %v358, 0.0
      %v369 = vmax.f32 %v363, 0.0
      %v370 = vld [vmem:[%s3] sm:$0xff]
      %v371 = vld [vmem:[%s3 + $0x8] sm:$0xff]
      %v372 = vld [vmem:[%s3 + $0x10] sm:$0xff]
      %v373 = vld [vmem:[%s3 + $0x18] sm:$0xff]
      %v374 = vld [vmem:[%s4] sm:$0x1]
      %v376 = vlaneseq
      %v377 = vshrl.u32 %v376, 7
      %v378 = vsub.s32 0, %v377
      %v379 = vrot.slane %v374, %v378
      %vm381 = vcmask 261120
      %v383 = vsel %vm381, %v366, 0
      %v386 = vsel %vm381, %v367, 0
      %v389 = vsel %vm381, %v368, 0
      %v392 = vsel %vm381, %v369, 0
      %394 = vmatprep.subr.mxu0 0.0
      %395 = vmatpush1.msra.mxu0 %v370
      %396 = vmatprep.subr.mxu0 0.0
      %397 = vmatpush1.msra.mxu0 %v371
      %398 = vmatprep.subr.mxu0 0.0
      %399 = vmatpush1.msra.mxu0 %v372
      %400 = vmatprep.subr.mxu0 0.0
      %401 = vmatpush1.msra.mxu0 %v373
      %402 = vmatprep.subr.mxu0 0.0
      %403 = vmatpush1.msra.mxu0 0.0
      %404 = vmatprep.subr.mxu0 0.0
      %405 = vmatpush1.msra.mxu0 0.0
      %406 = vmatprep.subr.mxu0 0.0
      %407 = vmatpush1.msra.mxu0 0.0
      %408 = vmatprep.subr.mxu0 0.0
      %409 = vmatpush1.msra.mxu0 0.0
      %410 = vmatprep.subr.mxu0 0.0
      %411 = vmatpush1.msra.mxu0 0.0
      %412 = vmatprep.subr.mxu0 0.0
      %413 = vmatpush1.msra.mxu0 0.0
      %414 = vmatprep.subr.mxu0 0.0
      %415 = vmatpush1.msra.mxu0 0.0
      %416 = vmatprep.subr.mxu0 0.0
      %417 = vmatpush1.msra.mxu0 0.0
      %418 = vmatprep.subr.mxu0 0.0
      %419 = vmatpush1.msra.mxu0 0.0
      %420 = vmatprep.subr.mxu0 0.0
      %421 = vmatpush1.msra.mxu0 0.0
      %422 = vmatprep.subr.mxu0 0.0
      %423 = vmatpush1.msra.mxu0 0.0
      %424 = vmatprep.subr.mxu0 0.0
      %425 = vmatpush1.msra.mxu0 0.0
      %426 = vmatprep.subr.mxu0 0.0
      %427 = vmatpush1.msra.mxu0 0.0
      %428 = vmatprep.subr.mxu0 0.0
      %429 = vmatpush1.msra.mxu0 0.0
      %430 = vmatprep.subr.mxu0 0.0
      %431 = vmatpush1.msra.mxu0 0.0
      %432 = vmatprep.subr.mxu0 0.0
      %433 = vmatpush1.msra.mxu0 0.0
      %434 = vmatprep.subr.mxu0 0.0
      %435 = vmatpush1.msra.mxu0 0.0
      %436 = vmatprep.subr.mxu0 0.0
      %437 = vmatpush1.msra.mxu0 0.0
      %438 = vmatprep.subr.mxu0 0.0
      %439 = vmatpush1.msra.mxu0 0.0
      %440 = vmatprep.subr.mxu0 0.0
      %441 = vmatpush1.msra.mxu0 0.0
      %442 = vmatprep.subr.mxu0 0.0
      %443 = vmatpush1.msra.mxu0 0.0
      %444 = vmatprep.subr.mxu0 0.0
      %445 = vmatpush1.msra.mxu0 0.0
      %446 = vmatprep.subr.mxu0 0.0
      %447 = vmatpush1.msra.mxu0 0.0
      %448 = vmatprep.subr.mxu0 0.0
      %449 = vmatpush1.msra.mxu0 0.0
      %450 = vmatprep.subr.mxu0 0.0
      %451 = vmatpush1.msra.mxu0 0.0
      %452 = vmatprep.subr.mxu0 0.0
      %453 = vmatpush1.msra.mxu0 0.0
      %454 = vmatprep.subr.mxu0 0.0
      %455 = vmatpush1.msra.mxu0 0.0
      %456 = vmatprep.subr.mxu0 0.0
      %457 = vmatpush1.msra.mxu0 0.0
      %458 = vmatprep.mubr.f32.mxu0 0.0
      %459 = vmatmul.mubr.f32.gmra.mrb[0].mxu0 %v383
      %v460 = vpop.f32.mrb[0].mxu0
      %v461 = vadd.f32 %v379, %v460
      %v462 = vpop.f32.mrb[0].mxu0
      %463 = vmatprep.mubr.f32.mxu0 0.0
      %464 = vmatmul.mubr.f32.gmra.mrb[0].mxu0 %v386
      %v465 = vpop.f32.mrb[0].mxu0
      %v466 = vadd.f32 %v379, %v465
      %v467 = vpop.f32.mrb[0].mxu0
      %468 = vmatprep.mubr.f32.mxu0 0.0
      %469 = vmatmul.mubr.f32.gmra.mrb[0].mxu0 %v389
      %v470 = vpop.f32.mrb[0].mxu0
      %v471 = vadd.f32 %v379, %v470
      %v472 = vpop.f32.mrb[0].mxu0
      %473 = vmatprep.mubr.f32.mxu0 0.0
      %474 = vmatmul.mubr.f32.gmra.mrb[0].mxu0 %v392
      %v475 = vpop.f32.mrb[0].mxu0
      %v476 = vadd.f32 %v379, %v475
      %v477 = vpop.f32.mrb[0].mxu0
      %478 = vdwg.mxu0
      %v479 = vld [vmem:[%s5] sm:$0xff]
      %vm480 = vcmask 64512
      %v482 = vsel %vm480, %v461, 0
      %v485 = vsel %vm480, %v466, 0
      %v488 = vsel %vm480, %v471, 0
      %v491 = vsel %vm480, %v476, 0
      %493 = vmatprep.subr.mxu0 0.0
      %494 = vmatpush1.msra.mxu0 %v479
      %495 = vmatprep.subr.mxu0 0.0
      %496 = vmatpush1.msra.mxu0 0.0
      %497 = vmatprep.subr.mxu0 0.0
      %498 = vmatpush1.msra.mxu0 0.0
      %499 = vmatprep.subr.mxu0 0.0
      %500 = vmatpush1.msra.mxu0 0.0
      %501 = vmatprep.subr.mxu0 0.0
      %502 = vmatpush1.msra.mxu0 0.0
      %503 = vmatprep.subr.mxu0 0.0
      %504 = vmatpush1.msra.mxu0 0.0
      %505 = vmatprep.subr.mxu0 0.0
      %506 = vmatpush1.msra.mxu0 0.0
      %507 = vmatprep.subr.mxu0 0.0
      %508 = vmatpush1.msra.mxu0 0.0
      %509 = vmatprep.subr.mxu0 0.0
      %510 = vmatpush1.msra.mxu0 0.0
      %511 = vmatprep.subr.mxu0 0.0
      %512 = vmatpush1.msra.mxu0 0.0
      %513 = vmatprep.subr.mxu0 0.0
      %514 = vmatpush1.msra.mxu0 0.0
      %515 = vmatprep.subr.mxu0 0.0
      %516 = vmatpush1.msra.mxu0 0.0
      %517 = vmatprep.subr.mxu0 0.0
      %518 = vmatpush1.msra.mxu0 0.0
      %519 = vmatprep.subr.mxu0 0.0
      %520 = vmatpush1.msra.mxu0 0.0
      %521 = vmatprep.subr.mxu0 0.0
      %522 = vmatpush1.msra.mxu0 0.0
      %523 = vmatprep.subr.mxu0 0.0
      %524 = vmatpush1.msra.mxu0 0.0
      %525 = vmatprep.subr.mxu0 0.0
      %526 = vmatpush1.msra.mxu0 0.0
      %527 = vmatprep.subr.mxu0 0.0
      %528 = vmatpush1.msra.mxu0 0.0
      %529 = vmatprep.subr.mxu0 0.0
      %530 = vmatpush1.msra.mxu0 0.0
      %531 = vmatprep.subr.mxu0 0.0
      %532 = vmatpush1.msra.mxu0 0.0
      %533 = vmatprep.subr.mxu0 0.0
      %534 = vmatpush1.msra.mxu0 0.0
      %535 = vmatprep.subr.mxu0 0.0
      %536 = vmatpush1.msra.mxu0 0.0
      %537 = vmatprep.subr.mxu0 0.0
      %538 = vmatpush1.msra.mxu0 0.0
      %539 = vmatprep.subr.mxu0 0.0
      %540 = vmatpush1.msra.mxu0 0.0
      %541 = vmatprep.subr.mxu0 0.0
      %542 = vmatpush1.msra.mxu0 0.0
      %543 = vmatprep.subr.mxu0 0.0
      %544 = vmatpush1.msra.mxu0 0.0
      %545 = vmatprep.subr.mxu0 0.0
      %546 = vmatpush1.msra.mxu0 0.0
      %547 = vmatprep.subr.mxu0 0.0
      %548 = vmatpush1.msra.mxu0 0.0
      %549 = vmatprep.subr.mxu0 0.0
      %550 = vmatpush1.msra.mxu0 0.0
      %551 = vmatprep.subr.mxu0 0.0
      %552 = vmatpush1.msra.mxu0 0.0
      %553 = vmatprep.subr.mxu0 0.0
      %554 = vmatpush1.msra.mxu0 0.0
      %555 = vmatprep.subr.mxu0 0.0
      %556 = vmatpush1.msra.mxu0 0.0
      %557 = vmatprep.mubr.f32.mxu0 0.0
      %558 = vmatmul.mubr.f32.gmra.mrb[0].mxu0 %v482
      %v559 = vpop.f32.mrb[0].mxu0
      %v560 = vadd.f32 0.0, %v559
      %v561 = vpop.f32.mrb[0].mxu0
      %562 = vmatprep.mubr.f32.mxu0 0.0
      %563 = vmatmul.mubr.f32.gmra.mrb[0].mxu0 %v485
      %v564 = vpop.f32.mrb[0].mxu0
      %v565 = vadd.f32 0.0, %v564
      %v566 = vpop.f32.mrb[0].mxu0
      %567 = vmatprep.mubr.f32.mxu0 0.0
      %568 = vmatmul.mubr.f32.gmra.mrb[0].mxu0 %v488
      %v569 = vpop.f32.mrb[0].mxu0
      %v570 = vadd.f32 0.0, %v569
      %v571 = vpop.f32.mrb[0].mxu0
      %572 = vmatprep.mubr.f32.mxu0 0.0
      %573 = vmatmul.mubr.f32.gmra.mrb[0].mxu0 %v491
      %v574 = vpop.f32.mrb[0].mxu0
      %v575 = vadd.f32 0.0, %v574
      %v576 = vpop.f32.mrb[0].mxu0
      %577 = vdwg.mxu0
      %vm578 = vcmask 80896
      %579 = vst.msk [vmem:[%s253] sm:$0xff] %vm578, %v560
      %580 = vst.msk [vmem:[%s253 + $0x8] sm:$0xff] %vm578, %v565
      %581 = vst.msk [vmem:[%s253 + $0x10] sm:$0xff] %vm578, %v570
      %582 = vst.msk [vmem:[%s253 + $0x18] sm:$0xff] %vm578, %v575
      %s583 = smul.u32 4, %s17
      %p584 = scmp.lt.s32.totalorder %s583, 7
      %s585 = scalar_select %p584, %s583, 7
      %s586 = smul.addr %s585, 8
      %s587 = scalar_lea.vmem %s6, %s586
      // Predicated region
      $region45: #{tpu_custom_call.1} parent=43 // pred_check
        %p588 = pneg %p166
      $region46: #{tpu_custom_call.1} parent=43 // pred_check_branch
        %590 = sbr.rel (%p588) target = $region48
      $region47: #{tpu_custom_call.1} parent=43 // pred_region
        %s591 = smul.u32 4, %s17
      $region48: #{tpu_custom_call.1} parent=43 // pred_fallthru
        _
    $region44: #{tpu_custom_call.1} parent=5 // pred_fallthru
      _
    %p592 = scmp.le.s32.totalorder 2, %s12
    // Predicated region
    $region49: #{tpu_custom_call.1} parent=5 // pred_check
      %p593 = pneg %p592
    $region50: #{tpu_custom_call.1} parent=5 // pred_check_branch
      %595 = sbr.rel (%p593) target = $region52
    $region51: #{tpu_custom_call.1} parent=5 // pred_region
      %s596 = ssub.s32 %s12, 2
      // Predicated region
      $region53: #{tpu_custom_call.1} parent=51 // pred_check
        %p597 = pneg %p172
      $region54: #{tpu_custom_call.1} parent=51 // pred_check_branch
        %599 = sbr.rel (%p597) target = $region56
      $region55: #{tpu_custom_call.1} parent=51 // pred_region
        %s600 = smul.u32 4, %s18
        %p601 = scmp.lt.s32.totalorder %s600, 7
        %s602 = scalar_select %p601, %s600, 7
        %s603 = smul.addr %s602, 8
        %s604 = scalar_lea.vmem %s6, %s603
      $region56: #{tpu_custom_call.1} parent=51 // pred_fallthru
        _
    $region52: #{tpu_custom_call.1} parent=5 // pred_fallthru
      _
  $region6: #{tpu_custom_call.1} parent=0 // loop_footer
    %s16 = sadd.s32 1, %s12
  $region7: #{tpu_custom_call.1} parent=0 // loop_footer_branch
    %11 = sbr.rel target = $region3
  $region8: #{tpu_custom_call.1} parent=0 // loop_exit
    _

</llo_original>
